<compile_context>
chip_gen: v6e
topology: v6e:2x2x1
jax: 0.10.0
libtpu: 0.0.40
codegen_flags: <defaults>
</compile_context>

<pallas_src>
import math

import jax
import jax.numpy as jnp
from jax.experimental import pallas as pl
from jax.experimental.pallas import tpu as pltpu


def _eca_kernel_factory(kernel_size: int):
    pad = (kernel_size - 1) // 2

    def kernel(w_ref, x_ref, o_ref):
        # w_ref: (k,) f32 in SMEM; x_ref block: (B_t, C, HW) in the input dtype.
        xv = x_ref[...]
        bt, c, _ = xv.shape
        xf = xv.astype(jnp.float32)

        # --- AdaptiveAvgPool2d(1): mean over the flattened spatial (lane) axis ---
        v = jnp.mean(xf, axis=-1)                        # (B_t, C), channels lane-resident

        # --- Conv1d(1, 1, k, padding=(k-1)//2, bias=False) across channels ---
        # Static rolls along the channel axis + edge masks emulate the zero-padded
        # conv with no padded-copy materialization (off the HBM-bound critical path).
        ch = jax.lax.broadcasted_iota(jnp.int32, (bt, c), 1)
        acc = jnp.zeros((bt, c), jnp.float32)
        for j in range(kernel_size):                     # static unroll (k is tiny)
            off = j - pad                                # source channel = c + off
            tap = w_ref[j]                               # scalar read from SMEM
            if off == 0:
                acc = acc + tap * v
            else:
                shifted = jnp.roll(v, -off, axis=1)      # shifted[:, c] = v[:, c + off]
                valid = (ch + off >= 0) & (ch + off < c)
                acc = acc + jnp.where(valid, tap * shifted, 0.0)

        # --- Sigmoid gate + broadcast multiply over the spatial axis ---
        gate = jax.nn.sigmoid(acc)                       # (B_t, C) f32
        o_ref[...] = (xf * gate[:, :, None]).astype(o_ref.dtype)

    return kernel


def eca_block(x, weight, *, target_block_bytes=4 * 1024 * 1024):
    """ECA forward. x: (N, C, H, W) any float dtype; weight: (k,) Conv1d taps (no bias)."""
    n, c, h, w = x.shape
    hw = h * w
    k = int(weight.shape[0])
    dsize = jnp.dtype(x.dtype).itemsize

    # ---- batch-block sizing: ~2-8 MB per block, keep >= 2 grid steps if possible ----
    per_batch_bytes = c * hw * dsize
    bt = max(1, min(n, target_block_bytes // max(per_batch_bytes, 1)))
    if bt >= n and n > 1:
        bt = max(1, (n + 1) // 2)        # >= 2 grid steps so both v7x TCs get work
    grid = pl.cdiv(n, bt)
    # NOTE: for fully lane-dense stores keep H*W a multiple of 128 when possible
    # (true here: 16*16=256); other H*W values remain correct (masked last lanes).
    # TODO(synk): two-pass spatially-tiled variant (tiled spatial reduction -> (N, C)
    # gate, then tiled broadcast-multiply) for slabs where even a single-batch
    # (1, C, HW) block would blow the v7x/v5e VMEM budget.

    x_flat = x.reshape(n, c, hw)                         # NO dtype upcast: HBM stays in x.dtype
    w_smem = weight.reshape(k).astype(jnp.float32)

    kernel = _eca_kernel_factory(k)

    cost = pl.CostEstimate(
        flops=2 * n * c * hw + 2 * n * c * k,
        transcendentals=n * c,
        bytes_accessed=2 * n * c * hw * dsize + k * 4,
    )

    out_flat = pl.pallas_call(
        kernel,
        out_shape=jax.ShapeDtypeStruct((n, c, hw), x.dtype),
        grid_spec=pltpu.PrefetchScalarGridSpec(
            num_scalar_prefetch=0,
            grid=(grid,),
            in_specs=[
                pl.BlockSpec(memory_space=pltpu.MemorySpace.SMEM),   # conv taps (k,)
                pl.BlockSpec((bt, c, hw), lambda b: (b, 0, 0)),      # batch slab
            ],
            out_specs=pl.BlockSpec((bt, c, hw), lambda b: (b, 0, 0)),
        ),
        compiler_params=pltpu.CompilerParams(
            dimension_semantics=("parallel",),
            vmem_limit_bytes=32 * 1024 * 1024,   # safe on v5e/v6e/v7x; 4 buffers fit with slack
        ),
        cost_estimate=cost,
    )(w_smem, x_flat)

    return out_flat.reshape(n, c, h, w)


def eca_reference(x, weight):
    """Pure-JAX reference mirroring the PyTorch module."""
    n, c, h, w = x.shape
    k = weight.shape[0]
    pad = (k - 1) // 2
    v = jnp.mean(x.astype(jnp.float32), axis=(2, 3))     # (N, C)
    vp = jnp.pad(v, ((0, 0), (pad, pad)))                # (N, C + 2*pad)
    conv = jnp.zeros_like(v)
    for j in range(k):
        conv = conv + weight[j] * vp[:, j:j + c]
    gate = jax.nn.sigmoid(conv)[:, :, None, None]        # (N, C, 1, 1)
    return (x.astype(jnp.float32) * gate).astype(x.dtype)


if __name__ == "__main__":
    # Module construction (channels=8 -> kernel_size computed like PyTorch __init__)
    channels, gamma, b = 8, 2, 1
    kernel_size = int(abs((math.log(channels, 2) + b) / gamma))
    kernel_size = kernel_size if kernel_size % 2 else kernel_size + 1   # -> 3

    key = jax.random.PRNGKey(0)
    kx, kw = jax.random.split(key)

    # Input: small NCHW batch
    x = jax.random.normal(kx, (2, channels, 16, 16), dtype=jnp.float32)

    # Deterministic Conv1d weight init (PyTorch-style uniform bound = 1/sqrt(fan_in))
    bound = 1.0 / math.sqrt(1 * kernel_size)
    weight = jax.random.uniform(
        kw, (kernel_size,), dtype=jnp.float32, minval=-bound, maxval=bound
    )

    out = eca_block(x, weight)
    out = jax.block_until_ready(out)

    ref = eca_reference(x, weight)
    assert out.shape == x.shape
    assert jnp.allclose(out, ref, atol=1e-5, rtol=1e-5), "mismatch vs reference"

    print("KERNEL_OK")
</pallas_src>

<mosaic_0001>
module attributes {stable_mosaic.version = 11 : i64} {
  func.func @kernel(%arg0: i32, %arg1: memref<3xf32, #tpu.memory_space<smem>>, %arg2: memref<1x8x256xf32, #tpu.memory_space<vmem>>, %arg3: memref<1x8x256xf32, #tpu.memory_space<vmem>>) attributes {dimension_semantics = [#tpu.dimension_semantics<parallel>], iteration_bounds = array<i64: 2>, scalar_prefetch = 0 : i64, scratch_operands = 0 : i64, tpu.core_type = #tpu.core_type<tc>, window_params = [{transform_indices = @transform_0, window_bounds = array<i64: 3>}, {transform_indices = @transform_1, window_bounds = array<i64: 1, 8, 256>}, {transform_indices = @transform_2, window_bounds = array<i64: 1, 8, 256>}]} {
    %c0 = arith.constant 0 : index
    %c0_0 = arith.constant 0 : index
    %c0_1 = arith.constant 0 : index
    %0 = vector.load %arg2[%c0, %c0_0, %c0_1] : memref<1x8x256xf32, #tpu.memory_space<vmem>>, vector<1x8x256xf32>
    %cst = arith.constant dense<0.000000e+00> : vector<1x8xf32>
    %1 = vector.multi_reduction <add>, %0, %cst [2] : vector<1x8x256xf32> to vector<1x8xf32>
    %cst_2 = arith.constant 2.560000e+02 : f32
    %2 = vector.broadcast %cst_2 : f32 to vector<1x8xf32>
    %3 = arith.divf %1, %2 : vector<1x8xf32>
    %4 = tpu.iota {dimensions = array<i32: 1>} : vector<1x8xi32>
    %cst_3 = arith.constant 0.000000e+00 : f32
    %5 = vector.broadcast %cst_3 : f32 to vector<1x8xf32>
    %c0_4 = arith.constant 0 : index
    %6 = memref.load %arg1[%c0_4] : memref<3xf32, #tpu.memory_space<smem>>
    %7 = vector.extract_strided_slice %3 {offsets = [0, 7], sizes = [1, 1], strides = [1, 1]} : vector<1x8xf32> to vector<1x1xf32>
    %8 = vector.extract_strided_slice %3 {offsets = [0, 0], sizes = [1, 7], strides = [1, 1]} : vector<1x8xf32> to vector<1x7xf32>
    %9 = tpu.concatenate %7, %8 in 1 : vector<1x1xf32>, vector<1x7xf32> -> vector<1x8xf32>
    %c-1_i32 = arith.constant -1 : i32
    %10 = vector.broadcast %c-1_i32 : i32 to vector<1x8xi32>
    %11 = arith.addi %4, %10 : vector<1x8xi32>
    %c0_i32 = arith.constant 0 : i32
    %12 = vector.broadcast %c0_i32 : i32 to vector<1x8xi32>
    %13 = arith.cmpi sge, %11, %12 : vector<1x8xi32>
    %c-1_i32_5 = arith.constant -1 : i32
    %14 = vector.broadcast %c-1_i32_5 : i32 to vector<1x8xi32>
    %15 = arith.addi %4, %14 : vector<1x8xi32>
    %c8_i32 = arith.constant 8 : i32
    %16 = vector.broadcast %c8_i32 : i32 to vector<1x8xi32>
    %17 = arith.cmpi slt, %15, %16 : vector<1x8xi32>
    %18 = arith.andi %13, %17 : vector<1x8xi1>
    %19 = vector.broadcast %6 : f32 to vector<1x8xf32>
    %20 = arith.mulf %19, %9 : vector<1x8xf32>
    %cst_6 = arith.constant 0.000000e+00 : f32
    %21 = vector.broadcast %cst_6 : f32 to vector<1x8xf32>
    %22 = arith.select %18, %20, %21 : vector<1x8xi1>, vector<1x8xf32>
    %23 = arith.addf %5, %22 : vector<1x8xf32>
    %c1 = arith.constant 1 : index
    %24 = memref.load %arg1[%c1] : memref<3xf32, #tpu.memory_space<smem>>
    %25 = vector.broadcast %24 : f32 to vector<1x8xf32>
    %26 = arith.mulf %25, %3 : vector<1x8xf32>
    %27 = arith.addf %23, %26 : vector<1x8xf32>
    %c2 = arith.constant 2 : index
    %28 = memref.load %arg1[%c2] : memref<3xf32, #tpu.memory_space<smem>>
    %29 = vector.extract_strided_slice %3 {offsets = [0, 1], sizes = [1, 7], strides = [1, 1]} : vector<1x8xf32> to vector<1x7xf32>
    %30 = vector.extract_strided_slice %3 {offsets = [0, 0], sizes = [1, 1], strides = [1, 1]} : vector<1x8xf32> to vector<1x1xf32>
    %31 = tpu.concatenate %29, %30 in 1 : vector<1x7xf32>, vector<1x1xf32> -> vector<1x8xf32>
    %c1_i32 = arith.constant 1 : i32
    %32 = vector.broadcast %c1_i32 : i32 to vector<1x8xi32>
    %33 = arith.addi %4, %32 : vector<1x8xi32>
    %c0_i32_7 = arith.constant 0 : i32
    %34 = vector.broadcast %c0_i32_7 : i32 to vector<1x8xi32>
    %35 = arith.cmpi sge, %33, %34 : vector<1x8xi32>
    %c1_i32_8 = arith.constant 1 : i32
    %36 = vector.broadcast %c1_i32_8 : i32 to vector<1x8xi32>
    %37 = arith.addi %4, %36 : vector<1x8xi32>
    %c8_i32_9 = arith.constant 8 : i32
    %38 = vector.broadcast %c8_i32_9 : i32 to vector<1x8xi32>
    %39 = arith.cmpi slt, %37, %38 : vector<1x8xi32>
    %40 = arith.andi %35, %39 : vector<1x8xi1>
    %41 = vector.broadcast %28 : f32 to vector<1x8xf32>
    %42 = arith.mulf %41, %31 : vector<1x8xf32>
    %cst_10 = arith.constant 0.000000e+00 : f32
    %43 = vector.broadcast %cst_10 : f32 to vector<1x8xf32>
    %44 = arith.select %40, %42, %43 : vector<1x8xi1>, vector<1x8xf32>
    %45 = arith.addf %27, %44 : vector<1x8xf32>
    %46 = arith.negf %45 : vector<1x8xf32>
    %47 = math.exp %46 : vector<1x8xf32>
    %cst_11 = arith.constant 1.000000e+00 : f32
    %48 = vector.broadcast %cst_11 : f32 to vector<1x8xf32>
    %49 = arith.addf %48, %47 : vector<1x8xf32>
    %50 = arith.divf %48, %49 : vector<1x8xf32>
    %51 = vector.shape_cast %50 : vector<1x8xf32> to vector<1x8x1xf32>
    %52 = vector.broadcast %51 : vector<1x8x1xf32> to vector<1x8x256xf32>
    %53 = arith.mulf %0, %52 : vector<1x8x256xf32>
    %c0_12 = arith.constant 0 : index
    %c0_13 = arith.constant 0 : index
    %c0_14 = arith.constant 0 : index
    %54 = vector.load %arg3[%c0_12, %c0_13, %c0_14] : memref<1x8x256xf32, #tpu.memory_space<vmem>>, vector<1x8x256xf32>
    tpu.vector_store %arg3[%c0_12, %c0_13, %c0_14], %53 {strides = array<i32>} : memref<1x8x256xf32, #tpu.memory_space<vmem>>, vector<1x8x256xf32>,
    return
  }
  func.func @transform_0(%arg0: i32) -> i32 {
    %c0_i32 = arith.constant 0 : i32
    %c0_i32_0 = arith.constant 0 : i32
    return %c0_i32 : i32
  }
  func.func @transform_1(%arg0: i32) -> (i32, i32, i32) {
    %c0_i32 = arith.constant 0 : i32
    %c0_i32_0 = arith.constant 0 : i32
    %c0_i32_1 = arith.constant 0 : i32
    return %arg0, %c0_i32, %c0_i32_0 : i32, i32, i32
  }
  func.func @transform_2(%arg0: i32) -> (i32, i32, i32) {
    %c0_i32 = arith.constant 0 : i32
    %c0_i32_0 = arith.constant 0 : i32
    %c0_i32_1 = arith.constant 0 : i32
    return %arg0, %c0_i32, %c0_i32_0 : i32, i32, i32
  }
}

</mosaic_0001>

<llo_original>
// kernel: tpu_custom_call.1
$region0: #{tpu_custom_call.1}
  #allocation0 [shape = 'u32[]', space=smem, size = 0x4, offset = 0x4, fixed_abs, tag = 'smem constant byte address 0x4 - core index']
  #allocation1 [shape = 'u32[144,128]{1,0:T(1,128)}', space=vmem, size = 0x12000, scoped, tag = 'internal scratch']
  %s0 = inlined_call_operand.hbm [shape: f32[3], index: 0, kind: input, shape index: {}]
  %s1 = inlined_call_operand.hbm [shape: f32[2,8,256], index: 1, kind: input, shape index: {}]
  %s2 = inlined_call_operand.hbm [shape: f32[2,8,256], index: 2, kind: output, shape index: {}]
  %s3 = sld [smem:[#allocation0]]
  $region49: #{tpu_custom_call.1} parent=0
    _
  %s5 = ssub.s32 1, %s3
  %s6 = scalar_select 0, %s5, %s3
  $region1: #{tpu_custom_call.1} parent=0
    #allocation2 [shape = 'u8[512]{0}', space=smem, size = 0x200, scoped, tag = 'input window, operand 0, single buffered']
    #allocation3 [shape = 's32[2]{0}', space=sflag, size = 0x8, scoped, tag = 'scoped memory for tpu_custom_call.1']
    #allocation4 [shape = 's32[2]{0}', space=sflag, size = 0x8, scoped, tag = 'scoped memory for tpu_custom_call.1']
    #allocation5 [shape = 's32[2]{0}', space=sflag, size = 0x8, scoped, tag = 'scoped memory for tpu_custom_call.1']
    #allocation6 [shape = 'u8[16384]{0}', space=vmem, size = 0x4000, scoped, tag = 'input window, operand 1']
    #allocation7 [shape = 'u8[16384]{0}', space=vmem, size = 0x4000, scoped, tag = 'output window, operand 0']
    %7 = vsyncpa [#allocation5], 0
    %8 = vsyncpa [#allocation3], 0
    %s9 = scalar_lea.sflag [#allocation3], 1
    %10 = vsyncpa %s9, 0
    %11 = vsyncpa [#allocation4], 0
    %s12 = scalar_lea.sflag [#allocation4], 1
    %13 = vsyncpa %s12, 0
    loop: start=0, step=1, limit=4
    $region2: #{tpu_custom_call.1} parent=1 // loop_pre_header
      _
    $region3: #{tpu_custom_call.1} parent=1 // loop_header
      %s15 = sphi 0, %s19
      %p16 = scmp.ge.s32.totalorder %s15, 4
      %s23 = sphi 0, %s23
      %s25 = sphi 0, %s23
      %s26 = sphi 0, %s25
      %s40 = sphi 0, %s26
      %s46 = sphi 0, %s48
      %s49 = sphi 0, %s46
      %s50 = sphi 0, %s49
      %s66 = sphi 0, %s50
      %s72 = sphi 0, %s74
      %s75 = sphi 0, %s72
      %s76 = sphi 0, %s75
      %s92 = sphi 0, %s76
    $region4: #{tpu_custom_call.1} parent=1 // loop_header_branch
      %18 = sbr.rel (%p16) target = $region8
    $region5: #{tpu_custom_call.1} parent=1 // loop_body
      %s20 = ssub.s32 %s15, 1
      %s21 = ssub.s32 %s15, 2
      %s22 = sadd.s32 %s15, 1
      %s24 = sadd.s32 %s23, 1
      %p27 = scmp.eq.s32.totalorder %s15, 1
      %p28 = scmp.ne.s32.totalorder %s23, %s25
      %p29 = scmp.eq.s32.totalorder %s15, 0
      %p30 = por %p28, %p29
      %p31 = scmp.ne.s32.totalorder %s23, %s25
      %p32 = scmp.eq.s32.totalorder %s20, 1
      %p33 = por %p31, %p32
      %p34 = scmp.ne.s32.totalorder %s25, %s26
      %p35 = scmp.eq.s32.totalorder %s20, 0
      %p36 = por %p34, %p35
      %p37 = scmp.ne.s32.totalorder %s25, %s26
      %p38 = scmp.eq.s32.totalorder %s21, 1
      %p39 = por %p37, %p38
      %p41 = scmp.ne.s32.totalorder %s26, %s40
      %p42 = scmp.eq.s32.totalorder %s21, 0
      %p43 = por %p41, %p42
      %s44 = ssub.s32 %s15, %s22
      %p45 = scmp.eq.s32.totalorder %s44, 0
      %s47 = sadd.s32 %s46, 1
      %s48 = scalar_select %p45, %s46, %s47
      %p51 = pneg %p45
      %p52 = scmp.eq.s32.totalorder %s15, 1
      %p53 = por %p51, %p52
      %p54 = scmp.ne.s32.totalorder %s46, %s49
      %p55 = scmp.eq.s32.totalorder %s15, 0
      %p56 = por %p54, %p55
      %p57 = scmp.ne.s32.totalorder %s46, %s49
      %p58 = scmp.eq.s32.totalorder %s20, 1
      %p59 = por %p57, %p58
      %p60 = scmp.ne.s32.totalorder %s49, %s50
      %p61 = scmp.eq.s32.totalorder %s20, 0
      %p62 = por %p60, %p61
      %p63 = scmp.ne.s32.totalorder %s49, %s50
      %p64 = scmp.eq.s32.totalorder %s21, 1
      %p65 = por %p63, %p64
      %p67 = scmp.ne.s32.totalorder %s50, %s66
      %p68 = scmp.eq.s32.totalorder %s21, 0
      %p69 = por %p67, %p68
      %s70 = ssub.s32 %s15, %s22
      %p71 = scmp.eq.s32.totalorder %s70, 0
      %s73 = sadd.s32 %s72, 1
      %s74 = scalar_select %p71, %s72, %s73
      %p77 = pneg %p71
      %p78 = scmp.eq.s32.totalorder %s15, 1
      %p79 = por %p77, %p78
      %p80 = scmp.ne.s32.totalorder %s72, %s75
      %p81 = scmp.eq.s32.totalorder %s15, 0
      %p82 = por %p80, %p81
      %p83 = scmp.ne.s32.totalorder %s72, %s75
      %p84 = scmp.eq.s32.totalorder %s20, 1
      %p85 = por %p83, %p84
      %p86 = scmp.ne.s32.totalorder %s75, %s76
      %p87 = scmp.eq.s32.totalorder %s20, 0
      %p88 = por %p86, %p87
      %p89 = scmp.ne.s32.totalorder %s75, %s76
      %p90 = scmp.eq.s32.totalorder %s21, 1
      %p91 = por %p89, %p90
      %p93 = scmp.ne.s32.totalorder %s76, %s92
      %p94 = scmp.eq.s32.totalorder %s21, 0
      %p95 = por %p93, %p94
      %p96 = scmp.le.s32.totalorder 1, %s15
      %p97 = scmp.lt.s32.totalorder %s15, 3
      %p98 = pnand %p96, %p97
      %p99 = pneg %p98
      // Predicated region
      $region9: #{tpu_custom_call.1} parent=5 // pred_check
        _
      $region10: #{tpu_custom_call.1} parent=5 // pred_check_branch
        %101 = sbr.rel (%p98) target = $region12
      $region11: #{tpu_custom_call.1} parent=5 // pred_region
        %s102 = ssub.s32 %s15, 1
        // Predicated region
        $region13: #{tpu_custom_call.1} parent=11 // pred_check
          %p103 = pneg %p36
        $region14: #{tpu_custom_call.1} parent=11 // pred_check_branch
          %105 = sbr.rel (%p103) target = $region16
        $region15: #{tpu_custom_call.1} parent=11 // pred_region
          %s107 = ssub.s32 16, 16
          %108 = vsyncadd [#allocation5], %s107
          %111 = dma.hbm_to_smem %s0, 16, [#allocation2], [#allocation5]
        $region16: #{tpu_custom_call.1} parent=11 // pred_fallthru
          _
      $region12: #{tpu_custom_call.1} parent=5 // pred_fallthru
        _
      %p112 = scmp.lt.s32.totalorder %s15, 2
      // Predicated region
      $region17: #{tpu_custom_call.1} parent=5 // pred_check
        %p113 = pneg %p112
      $region18: #{tpu_custom_call.1} parent=5 // pred_check_branch
        %115 = sbr.rel (%p113) target = $region20
      $region19: #{tpu_custom_call.1} parent=5 // pred_region
        // Predicated region
        $region21: #{tpu_custom_call.1} parent=19 // pred_check
          %p116 = pneg %p56
        $region22: #{tpu_custom_call.1} parent=19 // pred_check_branch
          %118 = sbr.rel (%p116) target = $region24
        $region23: #{tpu_custom_call.1} parent=19 // pred_region
          %s119 = sand.u32 %s46, 1
          %s120 = scalar_lea.sflag [#allocation3], %s119
          %s121 = sand.u32 %s46, 1
          %s122 = smul.addr %s121, 16
          %s123 = scalar_lea.vmem [#allocation6], %s122
          %s125 = ssub.s32 256, 256
          %126 = vsyncadd %s120, %s125
          %s127 = smul.addr %s15, 2
          %s128 = smul.addr %s127, 128
          %s129 = scalar_lea.hbm %s1, %s128
          %s131 = sshll.u32 %s123, 4
          %s132 = int_to_ptr.vmem [resolvable:$true] %s131
          %134 = dma.hbm_to_vmem [thread:$0]  %s129, 256, %s132, %s120
        $region24: #{tpu_custom_call.1} parent=19 // pred_fallthru
          _
      $region20: #{tpu_custom_call.1} parent=5 // pred_fallthru
        _
      %p135 = scmp.le.s32.totalorder 1, %s15
      %p136 = scmp.lt.s32.totalorder %s15, 3
      %p137 = pnand %p135, %p136
      %p138 = pneg %p137
      // Predicated region
      $region25: #{tpu_custom_call.1} parent=5 // pred_check
        _
      $region26: #{tpu_custom_call.1} parent=5 // pred_check_branch
        %140 = sbr.rel (%p137) target = $region28
      $region27: #{tpu_custom_call.1} parent=5 // pred_region
        %s141 = ssub.s32 %s15, 1
        // Predicated region
        $region29: #{tpu_custom_call.1} parent=27 // pred_check
          %p142 = pneg %p36
        $region30: #{tpu_custom_call.1} parent=27 // pred_check_branch
          %144 = sbr.rel (%p142) target = $region32
        $region31: #{tpu_custom_call.1} parent=27 // pred_region
          %145 = dma.done [#allocation5], 16
        $region32: #{tpu_custom_call.1} parent=27 // pred_fallthru
          _
        %s146 = sand.u32 %s49, 1
        %s147 = scalar_lea.sflag [#allocation3], %s146
        %s148 = sand.u32 %s49, 1
        %s149 = smul.addr %s148, 16
        %s150 = scalar_lea.vmem [#allocation6], %s149
        // Predicated region
        $region33: #{tpu_custom_call.1} parent=27 // pred_check
          %p151 = pneg %p62
        $region34: #{tpu_custom_call.1} parent=27 // pred_check_branch
          %153 = sbr.rel (%p151) target = $region36
        $region35: #{tpu_custom_call.1} parent=27 // pred_region
          %154 = dma.done %s147, 256
        $region36: #{tpu_custom_call.1} parent=27 // pred_fallthru
          _
        %155 = sfence
        %p156 = pneg %p36
        %p157 = pneg %p33
        %s158 = sand.u32 %s49, 1
        %s159 = scalar_lea.sflag [#allocation3], %s158
        %s160 = sand.u32 %s49, 1
        %s161 = smul.addr %s160, 16
        %s162 = scalar_lea.vmem [#allocation6], %s161
        %p163 = pneg %p62
        %p164 = pneg %p59
        %p165 = pneg %p88
        %p166 = pneg %p85
        %s167 = sand.u32 %s75, 1
        %s168 = scalar_lea.sflag [#allocation4], %s167
        %s169 = sand.u32 %s75, 1
        %s170 = smul.addr %s169, 16
        %s171 = scalar_lea.vmem [#allocation7], %s170
        %v172 = vld [vmem:[%s150] sm:$0xff]
        %v173 = vld [vmem:[%s150 + $0x8] sm:$0xff]
        %v174 = vadd.f32 %v172, %v173
        %175 = vadd.xlane.f32.xlu0 %v174
        %v176 = vpop.xlane.xlu0 %175
        %v177 = vrcp.pop 256.0
        %v178 = vmul.f32 %v176, %v177
        %v179 = vlaneseq
        %v180 = vand.u32 %v179, 127
        %s181 = sld [smem:[#allocation2]]
        %v183 = vadd.s32 %v180, 4294967295
        %v184 = vlaneseq
        %v185 = vshrl.u32 %v184, 7
        %v186 = vsub.s32 %v183, %v185
        %v187 = vrot.slane %v178, %v186
        %vm189 = vcmask 7168
        %v190 = vsel %vm189, %v178, %v187
        %vm191 = vcmp.ge.s32.totalorder %v183, 0
        %vm192 = vcmp.lt.s32.totalorder %v183, 8
        %vm193 = vmand %vm191, %vm192
        %v194 = vstv %s181
        %v195 = vmul.f32 %v194, %v190
        %v196 = vsel %vm193, %v195, 0.0
        %v197 = vadd.f32 %v196, 0.0
        %s198 = sld [smem:[#allocation2 + $0x1]]
        %v199 = vstv %s198
        %v200 = vmul.f32 %v199, %v178
        %v202 = vlaneseq
        %v203 = vshrl.u32 %v202, 7
        %v204 = vsub.s32 %v180, %v203
        %v205 = vrot.slane %v200, %v204
        %v207 = vadd.f32 %v197, %v205
        %s208 = sld [smem:[#allocation2 + $0x2]]
        %v209 = vadd.s32 %v180, 1
        %v210 = vlaneseq
        %v211 = vshrl.u32 %v210, 7
        %v212 = vsub.s32 %v209, %v211
        %v213 = vrot.slane %v178, %v212
        %v215 = vrot.slane %v178, 7
        %vm217 = vcmask 56320
        %v218 = vsel %vm217, %v213, %v215
        %vm219 = vcmp.ge.s32.totalorder %v209, 0
        %vm220 = vcmp.lt.s32.totalorder %v209, 8
        %vm221 = vmand %vm219, %vm220
        %v222 = vstv %s208
        %v223 = vmul.f32 %v222, %v218
        %v224 = vsel %vm221, %v223, 0.0
        %v226 = vrot.slane %v224, 2
        %v228 = vadd.f32 %v207, %v226
        %v229 = vxor.u32 %v228, 2147483648
        %v230 = vmul.f32 %v229, 1.442695
        %v231 = vpow.pop %v230
        %v232 = vadd.f32 %v231, 1.0
        %v233 = vrcp.pop %v232
        %v234 = vmul.f32 1.0, %v233
        %v235 = vlaneseq
        %v236 = vshrl.u32 %v235, 7
        %v237 = vsub.s32 7, %v236
        %v238 = vrot.slane %v234, %v237
        %240 = vbcast.lane.b32.xlu0 %v238, 256
        %v241 = vpop.permute.xlu0 %240
        %v242 = vmul.f32 %v172, %v241
        %v243 = vmul.f32 %v173, %v241
        %244 = vst [vmem:[%s171] sm:$0xff] %v242
        %245 = vst [vmem:[%s171 + $0x8] sm:$0xff] %v243
        %s246 = sand.u32 %s75, 1
        %s247 = scalar_lea.sflag [#allocation4], %s246
        %s248 = sand.u32 %s75, 1
        %s249 = smul.addr %s248, 16
        %s250 = scalar_lea.vmem [#allocation7], %s249
        // Predicated region
        $region37: #{tpu_custom_call.1} parent=27 // pred_check
          %p251 = pneg %p85
        $region38: #{tpu_custom_call.1} parent=27 // pred_check_branch
          %253 = sbr.rel (%p251) target = $region40
        $region39: #{tpu_custom_call.1} parent=27 // pred_region
          %s255 = ssub.s32 256, 256
          %256 = vsyncadd %s247, %s255
          %s257 = smul.addr %s20, 2
          %s258 = smul.addr %s257, 128
          %s259 = scalar_lea.hbm %s2, %s258
          %s261 = sshll.u32 %s250, 4
          %s262 = int_to_ptr.vmem [resolvable:$true] %s261
          %264 = dma.vmem_to_hbm [thread:$0]  %s262, 256, %s259, %s247
        $region40: #{tpu_custom_call.1} parent=27 // pred_fallthru
          _
      $region28: #{tpu_custom_call.1} parent=5 // pred_fallthru
        _
      %p265 = scmp.le.s32.totalorder 2, %s15
      // Predicated region
      $region41: #{tpu_custom_call.1} parent=5 // pred_check
        %p266 = pneg %p265
      $region42: #{tpu_custom_call.1} parent=5 // pred_check_branch
        %268 = sbr.rel (%p266) target = $region44
      $region43: #{tpu_custom_call.1} parent=5 // pred_region
        %s269 = ssub.s32 %s15, 2
        // Predicated region
        $region45: #{tpu_custom_call.1} parent=43 // pred_check
          %p270 = pneg %p91
        $region46: #{tpu_custom_call.1} parent=43 // pred_check_branch
          %272 = sbr.rel (%p270) target = $region48
        $region47: #{tpu_custom_call.1} parent=43 // pred_region
          %s273 = sand.u32 %s76, 1
          %s274 = scalar_lea.sflag [#allocation4], %s273
          %s275 = sand.u32 %s76, 1
          %s276 = smul.addr %s275, 16
          %s277 = scalar_lea.vmem [#allocation7], %s276
          %278 = dma.done %s274, 256
        $region48: #{tpu_custom_call.1} parent=43 // pred_fallthru
          _
      $region44: #{tpu_custom_call.1} parent=5 // pred_fallthru
        _
    $region6: #{tpu_custom_call.1} parent=1 // loop_footer
      %s19 = sadd.s32 1, %s15
    $region7: #{tpu_custom_call.1} parent=1 // loop_footer_branch
      %14 = sbr.rel target = $region3
    $region8: #{tpu_custom_call.1} parent=1 // loop_exit
      _
    %279 = vsyncpa [#allocation3], 1
    %s280 = scalar_lea.sflag [#allocation3], 1
    %281 = vsyncpa %s280, 1
    %282 = vsyncpa [#allocation4], 1
    %s283 = scalar_lea.sflag [#allocation4], 1
    %284 = vsyncpa %s283, 1
    %285 = vsyncpa [#allocation5], 1
    %s286 = scalar_lea.sflag [#allocation5], 1
    %287 = vsyncpa %s286, 1

</llo_original>
